<compile_context>
chip_gen: v5e
topology: v5e:2x2
jax: 0.10.0
libtpu: 0.0.40
codegen_flags: <defaults>
</compile_context>

<pallas_src>
import functools

import jax
import jax.numpy as jnp
from jax.experimental import pallas as pl
from jax.experimental.pallas import tpu as pltpu


def _focal_loss_kernel(logits_ref, targets_ref, partial_ref, *,
                       alpha, gamma, n_valid, tile_rows):
    # logits_ref:  (TN, C) input dtype, VMEM
    # targets_ref: (TN, 1) int32, VMEM
    # partial_ref: (1, 1)  float32, SMEM — per-tile partial sum
    pid = pl.program_id(0)

    raw = logits_ref[...]                               # (TN, C) input dtype
    tgt = targets_ref[...]                              # (TN, 1) int32

    # Row-validity mask for the ragged tail tile (no wrapper-side padding).
    row = pid * tile_rows + jax.lax.broadcasted_iota(
        jnp.int32, (tile_rows, 1), 0)                   # (TN, 1)
    valid = row < n_valid                               # (TN, 1) bool

    # Zero out invalid rows before max/exp: keeps everything finite.
    raw = jnp.where(valid, raw, jnp.zeros_like(raw))    # (TN, C)

    # Gather logits[target] with compare + select + lane sum on the raw dtype
    # tile (exact: only zeros are added); cast just the (TN, 1) column to f32.
    class_ids = jax.lax.broadcasted_iota(jnp.int32, raw.shape, 1)
    logit_t = jnp.sum(jnp.where(class_ids == tgt, raw, jnp.zeros_like(raw)),
                      axis=1, keepdims=True).astype(jnp.float32)  # (TN, 1)

    # Row max on the raw tile (exact in bf16), stable log-sum-exp in f32.
    m = jnp.max(raw, axis=1, keepdims=True).astype(jnp.float32)  # (TN, 1) XLU
    logits_f32 = raw.astype(jnp.float32)                         # (TN, C)
    e = jnp.exp(logits_f32 - m)                                  # (TN, C) EUP
    s = jnp.sum(e, axis=1, keepdims=True)                        # (TN, 1) XLU

    # Per-row cross entropy, pt and focal weight — all (TN, 1), cheap.
    ce = jnp.log(s) + m - logit_t                                # (TN, 1)
    pt = jnp.exp(-ce)                                            # (TN, 1)
    w = jnp.maximum(1.0 - pt, 0.0)                               # clamp fp slop
    if float(gamma) == 2.0:
        fw = w * w
    elif float(gamma) == 1.0:
        fw = w
    else:
        fw = w ** gamma
    focal = alpha * fw * ce                                      # (TN, 1)

    focal = jnp.where(valid, focal, 0.0)
    partial_ref[0, 0] = jnp.sum(focal)


def _choose_tile_rows(N, C, itemsize):
    """Pick tile rows from C/dtype against a per-tile VMEM budget."""
    # Per-row VMEM bytes: double-buffered input + ~3 (tn, C) f32 temporaries
    # (cast logits, shifted operand, exp result) + targets double-buffer.
    bytes_per_row = C * (2 * itemsize + 12) + 16
    budget = 24 * 1024 * 1024          # conservative across v5e/v6e/v7x
    tn_cap = max(8, ((budget // bytes_per_row) // 8) * 8)
    # ~4 MiB of streamed input bytes per tile amortizes the ~0.35us/step cost.
    tn_target = max(8, (((4 * 1024 * 1024) // max(1, C * itemsize)) // 8) * 8)
    tn = min(tn_cap, tn_target)
    n_pad8 = ((N + 7) // 8) * 8        # never bigger than the data needs
    return max(8, min(tn, n_pad8)), bytes_per_row


def focal_loss(logits, targets, alpha=1.0, gamma=2.0):
    """Pallas implementation of FocalLoss.forward.

    logits: (N, C) float array, targets: (N,) int array of class indices.
    Returns a scalar float32 loss.
    """
    N, C = logits.shape
    itemsize = jnp.dtype(logits.dtype).itemsize

    tn, bytes_per_row = _choose_tile_rows(N, C, itemsize)
    grid = int(pl.cdiv(N, tn))

    targets_2d = targets.astype(jnp.int32).reshape(N, 1)

    # Raise the scoped VMEM limit to the computed working set (+ headroom);
    # default scoped limits are 16 MiB (v5e) / 32 MiB (v6e/v7x).
    vmem_limit = int(min(32 << 20, max(tn * bytes_per_row + (1 << 20), 16 << 20)))

    cost = pl.CostEstimate(
        flops=int(8 * N * C),
        transcendentals=int(N * C + 3 * N),
        bytes_accessed=int(N * C * itemsize + N * 4 + grid * 4),
    )

    partials = pl.pallas_call(
        functools.partial(_focal_loss_kernel,
                          alpha=float(alpha), gamma=float(gamma),
                          n_valid=int(N), tile_rows=int(tn)),
        out_shape=jax.ShapeDtypeStruct((grid, 1), jnp.float32),
        grid_spec=pltpu.PrefetchScalarGridSpec(
            num_scalar_prefetch=0,
            grid=(grid,),
            in_specs=[
                pl.BlockSpec((tn, C), lambda i: (i, 0)),
                pl.BlockSpec((tn, 1), lambda i: (i, 0)),
            ],
            out_specs=pl.BlockSpec((1, 1), lambda i: (i, 0),
                                   memory_space=pltpu.SMEM),
        ),
        compiler_params=pltpu.CompilerParams(
            dimension_semantics=("parallel",),
            vmem_limit_bytes=vmem_limit),
        cost_estimate=cost,
    )(logits, targets_2d)

    return jnp.sum(partials) / jnp.float32(N)


def _reference_focal_loss(logits, targets, alpha=1.0, gamma=2.0):
    # Pure-JAX reference mirroring the PyTorch module.
    logp = jax.nn.log_softmax(logits.astype(jnp.float32), axis=1)
    ce = -jnp.take_along_axis(logp, targets[:, None].astype(jnp.int32),
                              axis=1)[:, 0]
    pt = jnp.exp(-ce)
    return jnp.mean(alpha * (1.0 - pt) ** gamma * ce)


if __name__ == "__main__":
    key = jax.random.PRNGKey(0)
    k_logits, k_targets = jax.random.split(key)

    N, C = 8, 32  # batch=8, num_classes=32
    logits = jax.random.normal(k_logits, (N, C), dtype=jnp.float32)
    targets = jax.random.randint(k_targets, (N,), 0, C, dtype=jnp.int32)

    loss = focal_loss(logits, targets, alpha=1.0, gamma=2.0)
    loss = jax.block_until_ready(loss)

    ref = jax.block_until_ready(_reference_focal_loss(logits, targets))
    assert jnp.allclose(loss, ref, atol=1e-5, rtol=1e-5), (loss, ref)

    print("KERNEL_OK")
</pallas_src>

<mosaic_0001>
module attributes {stable_mosaic.version = 11 : i64} {
  func.func @_focal_loss_kernel(%arg0: i32, %arg1: memref<8x32xf32, #tpu.memory_space<vmem>>, %arg2: memref<8x1xi32, #tpu.memory_space<vmem>>, %arg3: memref<1x1xf32, #tpu.memory_space<smem>>) attributes {dimension_semantics = [#tpu.dimension_semantics<parallel>], iteration_bounds = array<i64: 1>, scalar_prefetch = 0 : i64, scratch_operands = 0 : i64, tpu.core_type = #tpu.core_type<tc>, window_params = [{transform_indices = @transform_0, window_bounds = array<i64: 8, 32>}, {transform_indices = @transform_1, window_bounds = array<i64: 8, 1>}, {transform_indices = @transform_2, window_bounds = array<i64: 1, 1>}]} {
    %c0 = arith.constant 0 : index
    %c0_0 = arith.constant 0 : index
    %0 = vector.load %arg1[%c0, %c0_0] : memref<8x32xf32, #tpu.memory_space<vmem>>, vector<8x32xf32>
    %c0_1 = arith.constant 0 : index
    %c0_2 = arith.constant 0 : index
    %1 = vector.load %arg2[%c0_1, %c0_2] : memref<8x1xi32, #tpu.memory_space<vmem>>, vector<8x1xi32>
    %c8_i32 = arith.constant 8 : i32
    %2 = arith.muli %arg0, %c8_i32 : i32
    %3 = tpu.iota {dimensions = array<i32: 0>} : vector<8x1xi32>
    %4 = vector.broadcast %2 : i32 to vector<8x1xi32>
    %5 = arith.addi %4, %3 : vector<8x1xi32>
    %c8_i32_3 = arith.constant 8 : i32
    %6 = vector.broadcast %c8_i32_3 : i32 to vector<8x1xi32>
    %7 = arith.cmpi slt, %5, %6 : vector<8x1xi32>
    %cst = arith.constant 0.000000e+00 : f32
    %8 = vector.broadcast %cst : f32 to vector<8x32xf32>
    %9 = vector.shape_cast %7 : vector<8x1xi1> to vector<8x1xi1>
    %10 = vector.broadcast %9 : vector<8x1xi1> to vector<8x32xi1>
    %11 = arith.select %10, %0, %8 : vector<8x32xi1>, vector<8x32xf32>
    %12 = tpu.iota {dimensions = array<i32: 1>} : vector<8x32xi32>
    %13 = vector.broadcast %1 : vector<8x1xi32> to vector<8x32xi32>
    %14 = arith.cmpi eq, %12, %13 : vector<8x32xi32>
    %cst_4 = arith.constant 0.000000e+00 : f32
    %15 = vector.broadcast %cst_4 : f32 to vector<8x32xf32>
    %16 = arith.select %14, %11, %15 : vector<8x32xi1>, vector<8x32xf32>
    %cst_5 = arith.constant dense<0.000000e+00> : vector<8xf32>
    %17 = vector.multi_reduction <add>, %16, %cst_5 [1] : vector<8x32xf32> to vector<8xf32>
    %18 = vector.shape_cast %17 : vector<8xf32> to vector<8x1xf32>
    %cst_6 = arith.constant dense<0xFF800000> : vector<8xf32>
    %19 = vector.multi_reduction <maximumf>, %11, %cst_6 [1] : vector<8x32xf32> to vector<8xf32>
    %20 = vector.shape_cast %19 : vector<8xf32> to vector<8x1xf32>
    %21 = vector.broadcast %20 : vector<8x1xf32> to vector<8x32xf32>
    %22 = arith.subf %11, %21 : vector<8x32xf32>
    %23 = math.exp %22 : vector<8x32xf32>
    %cst_7 = arith.constant dense<0.000000e+00> : vector<8xf32>
    %24 = vector.multi_reduction <add>, %23, %cst_7 [1] : vector<8x32xf32> to vector<8xf32>
    %25 = vector.shape_cast %24 : vector<8xf32> to vector<8x1xf32>
    %26 = math.log %25 : vector<8x1xf32>
    %27 = arith.addf %26, %20 : vector<8x1xf32>
    %28 = arith.subf %27, %18 : vector<8x1xf32>
    %cst_8 = arith.constant 0.000000e+00 : f32
    %29 = vector.broadcast %cst_8 : f32 to vector<8x1xf32>
    %30 = arith.subf %29, %28 : vector<8x1xf32>
    %31 = math.exp %30 : vector<8x1xf32>
    %cst_9 = arith.constant 1.000000e+00 : f32
    %32 = vector.broadcast %cst_9 : f32 to vector<8x1xf32>
    %33 = arith.subf %32, %31 : vector<8x1xf32>
    %cst_10 = arith.constant 0.000000e+00 : f32
    %34 = vector.broadcast %cst_10 : f32 to vector<8x1xf32>
    %35 = arith.maximumf %33, %34 : vector<8x1xf32>
    %36 = arith.mulf %35, %35 : vector<8x1xf32>
    %cst_11 = arith.constant 1.000000e+00 : f32
    %37 = vector.broadcast %cst_11 : f32 to vector<8x1xf32>
    %38 = arith.mulf %37, %36 : vector<8x1xf32>
    %39 = arith.mulf %38, %28 : vector<8x1xf32>
    %cst_12 = arith.constant 0.000000e+00 : f32
    %40 = vector.broadcast %cst_12 : f32 to vector<8x1xf32>
    %41 = arith.select %7, %39, %40 : vector<8x1xi1>, vector<8x1xf32>
    %42 = vector.shape_cast %41 : vector<8x1xf32> to vector<1x8x1xf32>
    %cst_13 = arith.constant dense<0.000000e+00> : vector<1xf32>
    %43 = vector.multi_reduction <add>, %42, %cst_13 [1, 2] : vector<1x8x1xf32> to vector<1xf32>
    %44 = vector.shape_cast %43 : vector<1xf32> to vector<1x1x1xf32>
    %45 = vector.extract %44[0, 0, 0] : f32 from vector<1x1x1xf32>
    %c0_14 = arith.constant 0 : index
    %c0_15 = arith.constant 0 : index
    %46 = memref.load %arg3[%c0_14, %c0_15] : memref<1x1xf32, #tpu.memory_space<smem>>
    memref.store %45, %arg3[%c0_14, %c0_15] : memref<1x1xf32, #tpu.memory_space<smem>>
    return
  }
  func.func @transform_0(%arg0: i32) -> (i32, i32) {
    %c0_i32 = arith.constant 0 : i32
    %c0_i32_0 = arith.constant 0 : i32
    return %arg0, %c0_i32 : i32, i32
  }
  func.func @transform_1(%arg0: i32) -> (i32, i32) {
    %c0_i32 = arith.constant 0 : i32
    %c0_i32_0 = arith.constant 0 : i32
    return %arg0, %c0_i32 : i32, i32
  }
  func.func @transform_2(%arg0: i32) -> (i32, i32) {
    %c0_i32 = arith.constant 0 : i32
    %c0_i32_0 = arith.constant 0 : i32
    return %arg0, %c0_i32 : i32, i32
  }
}

</mosaic_0001>

<llo_original>
// kernel: tpu_custom_call.1
$region0: #{tpu_custom_call.1}
  #allocation0 [shape = 'u32[]', space=smem, size = 0x4, offset = 0x4, fixed_abs, tag = 'smem constant byte address 0x4 - core index']
  #allocation1 [shape = 'u32[72,128]{1,0:T(1,128)}', space=vmem, size = 0x9000, scoped, tag = 'internal scratch']
  %s0 = inlined_call_operand.vmem [shape: f32[8,32], index: 0, kind: input, shape index: {}]
  %s1 = inlined_call_operand.vmem [shape: s32[8,1], index: 1, kind: input, shape index: {}]
  %s2 = inlined_call_operand.hbm [shape: f32[1,1], index: 2, kind: output, shape index: {}]
  %s3 = sld [smem:[#allocation0]]
  $region18: #{tpu_custom_call.1} parent=0
    _
  %s5 = ssub.s32 1, %s3
  %s6 = scalar_select 0, %s5, %s3
  $region1: #{tpu_custom_call.1} parent=0
    #allocation2 [shape = 'u8[512]{0}', space=smem, size = 0x200, scoped, tag = 'output window, operand 0, single buffered']
    #allocation3 [shape = 's32[1]{0}', space=sflag, size = 0x4, scoped, tag = 'scoped memory for tpu_custom_call.1']
    %7 = vsyncpa [#allocation3], 0
    // Predicated region
    $region2: #{tpu_custom_call.1} parent=1 // pred_check
      _
    $region3: #{tpu_custom_call.1} parent=1 // pred_check_branch
      %9 = sbr.rel (0) target = $region5
    $region4: #{tpu_custom_call.1} parent=1 // pred_region
      _
    $region5: #{tpu_custom_call.1} parent=1 // pred_fallthru
      _
    // Predicated region
    $region6: #{tpu_custom_call.1} parent=1 // pred_check
      _
    $region7: #{tpu_custom_call.1} parent=1 // pred_check_branch
      %11 = sbr.rel (0) target = $region9
    $region8: #{tpu_custom_call.1} parent=1 // pred_region
      _
    $region9: #{tpu_custom_call.1} parent=1 // pred_fallthru
      _
    %v12 = vld [vmem:[%s0] sm:$0xff]
    %v13 = vld [vmem:[%s1] sm:$0xff]
    %s14 = smul.u32 0, 8
    %v15 = vlaneseq
    %v16 = vshrl.u32 %v15, 7
    %v17 = vstv %s14
    %v18 = vadd.s32 %v17, %v16
    %vm19 = vcmp.lt.s32.totalorder %v18, 8
    %v20 = vsel %vm19, 1, 0
    %vm21 = vcmp.eq.s32.totalorder %v20, 1
    %v22 = vsel %vm21, %v12, 0.0
    %v23 = vlaneseq
    %v24 = vand.u32 %v23, 127
    %25 = vset.pattern.permute.xlu0 0
    %26 = vperm.xlu0 %25, %v13
    %v27 = vpop.permute.xlu0 %26
    %vm28 = vcmp.eq.s32.totalorder %v24, %v27
    %v29 = vsel %vm28, %v22, 0.0
    %vm30 = vcmask 261120
    %v31 = vsel %vm30, %v29, 0.0
    %32 = vadd.xlane.f32.xlu0 %v31
    %v33 = vpop.xlane.xlu0 %32
    %v34 = vsel %vm30, %v22, -inf
    %35 = vmax.xlane.f32.xlu0 %v34
    %v36 = vpop.xlane.xlu0 %35
    %v37 = vsub.f32 %v22, %v36
    %v38 = vmul.f32 %v37, 1.442695
    %v39 = vpow.pop %v38
    %v40 = vsel %vm30, %v39, 0.0
    %41 = vadd.xlane.f32.xlu0 %v40
    %v42 = vpop.xlane.xlu0 %41
    %v43 = vlog2.pop %v42
    %v44 = vmul.f32 %v43, 0.6931472
    %v45 = vadd.f32 %v44, %v36
    %v46 = vsub.f32 %v45, %v33
    %v47 = vsub.f32 0.0, %v46
    %v48 = vmul.f32 %v47, 1.442695
    %v49 = vpow.pop %v48
    %v50 = vsub.f32 1.0, %v49
    %v51 = vmax.f32 %v50, 0.0
    %v52 = vmul.f32 %v51, %v51
    %v53 = vmul.f32 %v52, %v46
    %v54 = vsel %vm19, %v53, 0.0
    %vm55 = vcmask 7168
    %v56 = vsel %vm55, %v54, 0.0
    %57 = vadd.xlane.f32.xlu0 %v56
    %v58 = vpop.xlane.xlu0 %57
    %v59 = vrot.slane %v58, 4
    %v60 = vadd.f32 %v58, %v59
    %v61 = vrot.slane %v60, 2
    %v62 = vadd.f32 %v60, %v61
    %v63 = vrot.slane %v62, 1
    %v64 = vadd.f32 %v62, %v63
    %s65 = vtos %v64
    %s66 = scalar_lea.smem [#allocation2], 0
    %67 = sst [smem:[%s66]] %s65
    // Predicated region
    $region10: #{tpu_custom_call.1} parent=1 // pred_check
      _
    $region11: #{tpu_custom_call.1} parent=1 // pred_check_branch
      %69 = sbr.rel (0) target = $region13
    $region12: #{tpu_custom_call.1} parent=1 // pred_region
      %71 = vsyncadd [#allocation3], 0
      %s73 = sshll.u32 %s2, 4
      %s74 = int_to_ptr.hbm [resolvable:$true] %s73
      %76 = dma.smem_to_hbm [#allocation2], 16, %s74, [#allocation3]
    $region13: #{tpu_custom_call.1} parent=1 // pred_fallthru
      _
    // Predicated region
    $region14: #{tpu_custom_call.1} parent=1 // pred_check
      _
    $region15: #{tpu_custom_call.1} parent=1 // pred_check_branch
      %78 = sbr.rel (0) target = $region17
    $region16: #{tpu_custom_call.1} parent=1 // pred_region
      %80 = dma.done [#allocation3], 16
    $region17: #{tpu_custom_call.1} parent=1 // pred_fallthru
      _
    %81 = sfence
    %82 = vsyncpa [#allocation3], 1

</llo_original>
